<compile_context>
chip_gen: v7x
topology: tpu7x:2x2x1
jax: 0.10.0
libtpu: 0.0.40
codegen_flags: <defaults>
</compile_context>

<pallas_src>
import functools

import jax
import jax.numpy as jnp
from jax.experimental import pallas as pl
from jax.experimental.pallas import tpu as pltpu

_INV_SQRT2 = 0.7071067811865476
_EPS = 1e-12


def _gelu(h, approximate):
    if approximate:
        return jax.nn.gelu(h, approximate=True)        # tanh path -> EUP
    return 0.5 * h * (1.0 + jax.lax.erf(h * _INV_SQRT2))  # exact nn.GELU()


def _ff_kernel_single(x_ref, w1_ref, b1_ref, w2_ref, b2_ref, g_ref, o_ref,
                      *, d_true, approximate):
    """block_h == H: full weights resident, no accumulator scratch needed."""
    x = x_ref[...]                                     # (bm, Dp), input dtype
    h = jnp.dot(x.astype(w1_ref.dtype), w1_ref[...],
                preferred_element_type=jnp.float32)
    h = h + b1_ref[...].astype(jnp.float32)
    h = _gelu(h, approximate)
    # dropout is identity in eval mode
    # TODO(synk): training-mode dropout (pltpu.prng_*) not implemented; eval only.
    y = jnp.dot(h.astype(w2_ref.dtype), w2_ref[...],
                preferred_element_type=jnp.float32)
    y = y + b2_ref[...].astype(jnp.float32) + x.astype(jnp.float32)
    # RMSNorm over the true d_model (padded lanes are exactly zero).
    var = jnp.sum(y * y, axis=-1, keepdims=True) * (1.0 / d_true)
    y = y * jax.lax.rsqrt(var + _EPS)
    o_ref[...] = (y * g_ref[...].astype(jnp.float32)).astype(o_ref.dtype)


def _ff_kernel_reduce(x_ref, w1_ref, b1_ref, w2_ref, b2_ref, g_ref, o_ref,
                      acc_ref, *, d_true, approximate):
    """block_h < H: accumulate W2 contributions over the H grid axis (>= 2 tiles)."""
    j = pl.program_id(1)
    n_h = pl.num_programs(1)

    x = x_ref[...]                                     # (bm, Dp)
    h = jnp.dot(x.astype(w1_ref.dtype), w1_ref[...],
                preferred_element_type=jnp.float32)
    h = h + b1_ref[...].astype(jnp.float32)
    h = _gelu(h, approximate)
    contrib = jnp.dot(h.astype(w2_ref.dtype), w2_ref[...],
                      preferred_element_type=jnp.float32)

    @pl.when(j == 0)
    def _():
        acc_ref[...] = contrib

    @pl.when(jnp.logical_and(j > 0, j < n_h - 1))
    def _():
        acc_ref[...] += contrib

    @pl.when(j == n_h - 1)
    def _():
        # Fold the last contribution straight into finalize (no acc re-write).
        y = (acc_ref[...] + contrib
             + b2_ref[...].astype(jnp.float32) + x.astype(jnp.float32))
        var = jnp.sum(y * y, axis=-1, keepdims=True) * (1.0 / d_true)
        y = y * jax.lax.rsqrt(var + _EPS)
        o_ref[...] = (y * g_ref[...].astype(jnp.float32)).astype(o_ref.dtype)


def _vmem_capacity_bytes():
    try:
        return int(pltpu.get_tpu_info().vmem_capacity_bytes)
    except Exception:
        return 64 << 20                                 # conservative (v7x)


def _vmem_tile_bytes(bm, th, D, in_bytes, w_bytes, out_bytes):
    return (2 * bm * D * in_bytes        # x tiles (double-buffered)
            + bm * D * w_bytes           # bf16 cast copy of x for the MXU
            + 2 * D * th * w_bytes       # W1 tiles
            + 2 * th * 4                 # b1 tiles
            + 2 * th * D * w_bytes       # W2 tiles
            + 4 * D * 4                  # b2 + rms-weight tiles
            + 2 * bm * D * out_bytes     # output tiles
            + bm * D * 4                 # fp32 accumulator scratch
            + bm * th * (4 + w_bytes))   # GELU intermediate (fp32 + bf16 copy)


def _pick_tiles(M, H, D, in_bytes, w_bytes, out_bytes, budget_bytes):
    # Prefer th == H first: weight index_maps become grid-invariant so W1/W2 are
    # DMA'd from HBM exactly once (biggest lever, esp. on v5e's ~820 GB/s HBM).
    th_cands = [H] + [t for t in (2048, 1024, 512, 256, 128) if t < H and H % t == 0]
    # Largest bm first (fewest grid steps / weight re-fetches), but keep at
    # least 2 M tiles when M allows so the parallel axis feeds both v7x cores.
    bm_cands = [b for b in (1024, 512, 256, 128) if b <= M]
    if M > 128:
        bm_cands = [b for b in bm_cands if b < M] or [128]
    if not bm_cands:
        bm_cands = [min(((M + 7) // 8) * 8, 128)]
    for th in th_cands:
        for bm in bm_cands:
            if _vmem_tile_bytes(bm, th, D, in_bytes, w_bytes, out_bytes) <= budget_bytes:
                return bm, th
    return bm_cands[-1], th_cands[-1]


def feed_forward(x, w1, b1, w2, b2, rms_weight, *,
                 mxu_dtype=jnp.bfloat16, gelu_approximate=False,
                 block_m=None, block_h=None):
    """x: [B, L, D]. w1: [D, H] (pre-transposed), b1: [H], w2: [H, D], b2: [D],
    rms_weight: [D]. Returns [B, L, D] in x.dtype.

    For repeated (inference-style) calls, pre-cast w1/w2 to `mxu_dtype` once and
    pass them directly; the per-call cast is skipped when dtypes already match.
    """
    B, L, D = x.shape
    H = w1.shape[1]
    assert w1.shape == (D, H) and w2.shape == (H, D)
    M = B * L

    # Lane-pad d_model to a multiple of 128 (zero padding is exact: padded
    # columns of y stay 0, RMSNorm divides by the true D, padded output sliced).
    D_pad = max(128, -(-D // 128) * 128)

    in_bytes = jnp.dtype(x.dtype).itemsize
    w_bytes = jnp.dtype(mxu_dtype).itemsize
    out_bytes = in_bytes

    cap = _vmem_capacity_bytes()
    budget = int(0.55 * cap)           # ~70 MiB on 128 MiB parts, ~35 MiB on v7x

    if block_m is None or block_h is None:
        bm, th = _pick_tiles(M, H, D_pad, in_bytes, w_bytes, out_bytes, budget)
        block_m = bm if block_m is None else block_m
        block_h = th if block_h is None else block_h
    assert H % block_h == 0, "block_h must divide inner_size"

    x2 = x.reshape(M, D)
    M_pad = -(-M // block_m) * block_m
    if M_pad != M or D_pad != D:
        x2 = jnp.pad(x2, ((0, M_pad - M), (0, D_pad - D)))

    # Cast MXU-facing weights only if needed; pad to the lane-dense width.
    w1c = w1 if w1.dtype == mxu_dtype else w1.astype(mxu_dtype)
    w2c = w2 if w2.dtype == mxu_dtype else w2.astype(mxu_dtype)
    if D_pad != D:
        w1c = jnp.pad(w1c, ((0, D_pad - D), (0, 0)))
        w2c = jnp.pad(w2c, ((0, 0), (0, D_pad - D)))
    b1_2 = b1.reshape(1, H).astype(jnp.float32)
    b2_2 = jnp.pad(b2.reshape(1, D).astype(jnp.float32), ((0, 0), (0, D_pad - D)))
    g_2 = jnp.pad(rms_weight.reshape(1, D).astype(jnp.float32), ((0, 0), (0, D_pad - D)))

    n_m = M_pad // block_m
    n_h = H // block_h

    vmem_need = _vmem_tile_bytes(block_m, block_h, D_pad, in_bytes, w_bytes, out_bytes)
    vmem_limit = min(vmem_need + (16 << 20), int(0.75 * cap))
    vmem_limit = max(vmem_limit, vmem_need + (2 << 20))       # never below need
    vmem_limit = int(min(vmem_limit, cap - (4 << 20)))        # leave HW headroom

    weight_fetches = 1 if n_h == 1 else n_m
    cost = pl.CostEstimate(
        flops=4 * M_pad * D_pad * H,
        transcendentals=M_pad * H,
        bytes_accessed=(M_pad * D_pad * (in_bytes + out_bytes)
                        + weight_fetches * 2 * D_pad * H * w_bytes
                        + (H + 2 * D_pad) * 4),
    )

    if n_h == 1:
        # Full inner_size resident: 1-D grid, grid-invariant weight specs
        # (weights DMA'd once), no accumulator scratch.
        kernel = functools.partial(_ff_kernel_single,
                                   d_true=float(D), approximate=gelu_approximate)
        grid_spec = pltpu.PrefetchScalarGridSpec(
            num_scalar_prefetch=0,
            grid=(n_m,),
            in_specs=[
                pl.BlockSpec((block_m, D_pad), lambda i: (i, 0)),   # x tile
                pl.BlockSpec((D_pad, H), lambda i: (0, 0)),         # W1 (resident)
                pl.BlockSpec((1, H), lambda i: (0, 0)),             # b1
                pl.BlockSpec((H, D_pad), lambda i: (0, 0)),         # W2 (resident)
                pl.BlockSpec((1, D_pad), lambda i: (0, 0)),         # b2
                pl.BlockSpec((1, D_pad), lambda i: (0, 0)),         # RMSNorm weight
            ],
            out_specs=pl.BlockSpec((block_m, D_pad), lambda i: (i, 0)),
        )
        dim_sem = ("parallel",)
    else:
        kernel = functools.partial(_ff_kernel_reduce,
                                   d_true=float(D), approximate=gelu_approximate)
        grid_spec = pltpu.PrefetchScalarGridSpec(
            num_scalar_prefetch=0,
            grid=(n_m, n_h),
            in_specs=[
                pl.BlockSpec((block_m, D_pad), lambda i, j: (i, 0)),  # x tile
                pl.BlockSpec((D_pad, block_h), lambda i, j: (0, j)),  # W1 H-slice
                pl.BlockSpec((1, block_h), lambda i, j: (0, j)),      # b1 slice
                pl.BlockSpec((block_h, D_pad), lambda i, j: (j, 0)),  # W2 H-slice
                pl.BlockSpec((1, D_pad), lambda i, j: (0, 0)),        # b2
                pl.BlockSpec((1, D_pad), lambda i, j: (0, 0)),        # RMSNorm weight
            ],
            out_specs=pl.BlockSpec((block_m, D_pad), lambda i, j: (i, 0)),
            scratch_shapes=[pltpu.VMEM((block_m, D_pad), jnp.float32)],
        )
        dim_sem = ("parallel", "arbitrary")

    out = pl.pallas_call(
        kernel,
        out_shape=jax.ShapeDtypeStruct((M_pad, D_pad), x.dtype),
        grid_spec=grid_spec,
        compiler_params=pltpu.CompilerParams(
            dimension_semantics=dim_sem,
            vmem_limit_bytes=vmem_limit,
        ),
        cost_estimate=cost,
    )(x2, w1c, b1_2, w2c, b2_2, g_2)

    return out[:M, :D].reshape(B, L, D)


def _reference(x2, w1, b1, w2, b2, g):
    h = x2 @ w1 + b1
    h = 0.5 * h * (1.0 + jax.lax.erf(h * _INV_SQRT2))
    h = h @ w2 + b2
    y = h + x2
    var = jnp.mean(y * y, axis=-1, keepdims=True)
    return g * (y * jax.lax.rsqrt(var + _EPS))


if __name__ == "__main__":
    # Small shapes implied by the module: d_model=32, inner_size=64, batch=2, seq=8.
    B, L, D, H = 2, 8, 32, 64
    key = jax.random.PRNGKey(0)
    kx, kw1, kb1, kw2, kb2 = jax.random.split(key, 5)

    x = jax.random.normal(kx, (B, L, D), dtype=jnp.float32)
    w1 = jax.random.uniform(kw1, (D, H), jnp.float32, -1.0, 1.0) / jnp.sqrt(D)
    b1 = jax.random.uniform(kb1, (H,), jnp.float32, -1.0, 1.0) / jnp.sqrt(D)
    w2 = jax.random.uniform(kw2, (H, D), jnp.float32, -1.0, 1.0) / jnp.sqrt(H)
    b2 = jax.random.uniform(kb2, (D,), jnp.float32, -1.0, 1.0) / jnp.sqrt(H)
    g = jnp.ones((D,), dtype=jnp.float32)

    ref = _reference(x.reshape(-1, D), w1, b1, w2, b2, g).reshape(B, L, D)

    # Exact fp32 MXU path (single-tile, weights-resident kernel) — tight check.
    out_fp32 = jax.block_until_ready(
        feed_forward(x, w1, b1, w2, b2, g, mxu_dtype=jnp.float32))
    assert out_fp32.shape == (B, L, D)
    assert jnp.allclose(out_fp32, ref, atol=1e-5, rtol=1e-5), "fp32 mismatch"

    # Default performance path: bf16 MXU inputs, fp32 accumulation / norm math.
    out_bf16 = jax.block_until_ready(feed_forward(x, w1, b1, w2, b2, g))
    assert jnp.allclose(out_bf16, ref, atol=5e-2, rtol=5e-2), "bf16 mismatch"

    # Exercise the reduction path (multi-step M & H grid, fp32 accumulator with
    # pl.when init / fused finalize) at a still-small shape.
    B2, L2, D2, H2 = 2, 64, 128, 256
    k2 = jax.random.split(jax.random.PRNGKey(1), 5)
    x_t = jax.random.normal(k2[0], (B2, L2, D2), dtype=jnp.float32)
    w1_t = jax.random.uniform(k2[1], (D2, H2), jnp.float32, -1.0, 1.0) / jnp.sqrt(D2)
    b1_t = jax.random.uniform(k2[2], (H2,), jnp.float32, -1.0, 1.0) / jnp.sqrt(D2)
    w2_t = jax.random.uniform(k2[3], (H2, D2), jnp.float32, -1.0, 1.0) / jnp.sqrt(H2)
    b2_t = jax.random.uniform(k2[4], (D2,), jnp.float32, -1.0, 1.0) / jnp.sqrt(H2)
    g_t = jnp.ones((D2,), dtype=jnp.float32)

    ref_t = _reference(x_t.reshape(-1, D2), w1_t, b1_t, w2_t, b2_t,
                       g_t).reshape(B2, L2, D2)
    out_t = jax.block_until_ready(
        feed_forward(x_t, w1_t, b1_t, w2_t, b2_t, g_t,
                     mxu_dtype=jnp.float32, block_m=64, block_h=128))
    assert jnp.allclose(out_t, ref_t, atol=1e-3, rtol=1e-3), "tiled fp32 mismatch"

    # Tanh-approximate GELU option (EUP path) — looser check vs the erf reference.
    out_tanh = jax.block_until_ready(
        feed_forward(x, w1, b1, w2, b2, g, mxu_dtype=jnp.float32,
                     gelu_approximate=True))
    assert jnp.allclose(out_tanh, ref, atol=5e-2, rtol=5e-2), "tanh-gelu mismatch"

    print("KERNEL_OK")
</pallas_src>

<mosaic_0001>
module attributes {stable_mosaic.version = 11 : i64} {
  func.func @_ff_kernel_single(%arg0: i32, %arg1: memref<16x128xf32, #tpu.memory_space<vmem>>, %arg2: memref<128x64xf32, #tpu.memory_space<vmem>>, %arg3: memref<1x64xf32, #tpu.memory_space<vmem>>, %arg4: memref<64x128xf32, #tpu.memory_space<vmem>>, %arg5: memref<1x128xf32, #tpu.memory_space<vmem>>, %arg6: memref<1x128xf32, #tpu.memory_space<vmem>>, %arg7: memref<16x128xf32, #tpu.memory_space<vmem>>) attributes {dimension_semantics = [#tpu.dimension_semantics<parallel>], iteration_bounds = array<i64: 1>, scalar_prefetch = 0 : i64, scratch_operands = 0 : i64, tpu.core_type = #tpu.core_type<tc>, window_params = [{transform_indices = @transform_0, window_bounds = array<i64: 16, 128>}, {pipeline_mode = #tpu.pipeline_mode<synchronous>, transform_indices = @transform_1, window_bounds = array<i64: 128, 64>}, {pipeline_mode = #tpu.pipeline_mode<synchronous>, transform_indices = @transform_2, window_bounds = array<i64: 1, 64>}, {pipeline_mode = #tpu.pipeline_mode<synchronous>, transform_indices = @transform_3, window_bounds = array<i64: 64, 128>}, {pipeline_mode = #tpu.pipeline_mode<synchronous>, transform_indices = @transform_4, window_bounds = array<i64: 1, 128>}, {pipeline_mode = #tpu.pipeline_mode<synchronous>, transform_indices = @transform_5, window_bounds = array<i64: 1, 128>}, {transform_indices = @transform_6, window_bounds = array<i64: 16, 128>}]} {
    %c0 = arith.constant 0 : index
    %c0_0 = arith.constant 0 : index
    %0 = vector.load %arg1[%c0, %c0_0] : memref<16x128xf32, #tpu.memory_space<vmem>>, vector<16x128xf32>
    %c0_1 = arith.constant 0 : index
    %c0_2 = arith.constant 0 : index
    %1 = vector.load %arg2[%c0_1, %c0_2] : memref<128x64xf32, #tpu.memory_space<vmem>>, vector<128x64xf32>
    %cst = arith.constant dense<0.000000e+00> : vector<16x64xf32>
    %2 = tpu.matmul %0, %1, %cst {dimension_numbers = #tpu.dot_dimension_numbers<[1], [0], [0], [1], [0, 0, 1, 1], [], []>} : vector<16x128xf32>, vector<128x64xf32>, vector<16x64xf32> -> vector<16x64xf32>
    %c0_3 = arith.constant 0 : index
    %c0_4 = arith.constant 0 : index
    %3 = vector.load %arg3[%c0_3, %c0_4] : memref<1x64xf32, #tpu.memory_space<vmem>>, vector<1x64xf32>
    %4 = vector.broadcast %3 : vector<1x64xf32> to vector<16x64xf32>
    %5 = arith.addf %2, %4 : vector<16x64xf32>
    %cst_5 = arith.constant 5.000000e-01 : f32
    %6 = vector.broadcast %cst_5 : f32 to vector<16x64xf32>
    %7 = arith.mulf %6, %5 : vector<16x64xf32>
    %cst_6 = arith.constant 0.707106769 : f32
    %8 = vector.broadcast %cst_6 : f32 to vector<16x64xf32>
    %9 = arith.mulf %5, %8 : vector<16x64xf32>
    %10 = math.erf %9 : vector<16x64xf32>
    %cst_7 = arith.constant 1.000000e+00 : f32
    %11 = vector.broadcast %cst_7 : f32 to vector<16x64xf32>
    %12 = arith.addf %11, %10 : vector<16x64xf32>
    %13 = arith.mulf %7, %12 : vector<16x64xf32>
    %c0_8 = arith.constant 0 : index
    %c0_9 = arith.constant 0 : index
    %14 = vector.load %arg4[%c0_8, %c0_9] : memref<64x128xf32, #tpu.memory_space<vmem>>, vector<64x128xf32>
    %cst_10 = arith.constant dense<0.000000e+00> : vector<16x128xf32>
    %15 = tpu.matmul %13, %14, %cst_10 {dimension_numbers = #tpu.dot_dimension_numbers<[1], [0], [0], [1], [0, 0, 1, 1], [], []>} : vector<16x64xf32>, vector<64x128xf32>, vector<16x128xf32> -> vector<16x128xf32>
    %c0_11 = arith.constant 0 : index
    %c0_12 = arith.constant 0 : index
    %16 = vector.load %arg5[%c0_11, %c0_12] : memref<1x128xf32, #tpu.memory_space<vmem>>, vector<1x128xf32>
    %17 = vector.broadcast %16 : vector<1x128xf32> to vector<16x128xf32>
    %18 = arith.addf %15, %17 : vector<16x128xf32>
    %19 = arith.addf %18, %0 : vector<16x128xf32>
    %20 = arith.mulf %19, %19 : vector<16x128xf32>
    %cst_13 = arith.constant dense<0.000000e+00> : vector<16xf32>
    %21 = vector.multi_reduction <add>, %20, %cst_13 [1] : vector<16x128xf32> to vector<16xf32>
    %22 = vector.shape_cast %21 : vector<16xf32> to vector<16x1xf32>
    %cst_14 = arith.constant 3.125000e-02 : f32
    %23 = vector.broadcast %cst_14 : f32 to vector<16x1xf32>
    %24 = arith.mulf %22, %23 : vector<16x1xf32>
    %cst_15 = arith.constant 9.99999996E-13 : f32
    %25 = vector.broadcast %cst_15 : f32 to vector<16x1xf32>
    %26 = arith.addf %24, %25 : vector<16x1xf32>
    %27 = math.rsqrt %26 : vector<16x1xf32>
    %28 = vector.broadcast %27 : vector<16x1xf32> to vector<16x128xf32>
    %29 = arith.mulf %19, %28 : vector<16x128xf32>
    %c0_16 = arith.constant 0 : index
    %c0_17 = arith.constant 0 : index
    %30 = vector.load %arg6[%c0_16, %c0_17] : memref<1x128xf32, #tpu.memory_space<vmem>>, vector<1x128xf32>
    %31 = vector.broadcast %30 : vector<1x128xf32> to vector<16x128xf32>
    %32 = arith.mulf %29, %31 : vector<16x128xf32>
    %c0_18 = arith.constant 0 : index
    %c0_19 = arith.constant 0 : index
    %33 = vector.load %arg7[%c0_18, %c0_19] : memref<16x128xf32, #tpu.memory_space<vmem>>, vector<16x128xf32>
    tpu.vector_store %arg7[%c0_18, %c0_19], %32 {strides = array<i32>} : memref<16x128xf32, #tpu.memory_space<vmem>>, vector<16x128xf32>,
    return
  }
  func.func @transform_0(%arg0: i32) -> (i32, i32) {
    %c0_i32 = arith.constant 0 : i32
    %c0_i32_0 = arith.constant 0 : i32
    return %arg0, %c0_i32 : i32, i32
  }
  func.func @transform_1(%arg0: i32) -> (i32, i32) {
    %c0_i32 = arith.constant 0 : i32
    %c0_i32_0 = arith.constant 0 : i32
    %c0_i32_1 = arith.constant 0 : i32
    return %c0_i32, %c0_i32_0 : i32, i32
  }
  func.func @transform_2(%arg0: i32) -> (i32, i32) {
    %c0_i32 = arith.constant 0 : i32
    %c0_i32_0 = arith.constant 0 : i32
    %c0_i32_1 = arith.constant 0 : i32
    return %c0_i32, %c0_i32_0 : i32, i32
  }
  func.func @transform_3(%arg0: i32) -> (i32, i32) {
    %c0_i32 = arith.constant 0 : i32
    %c0_i32_0 = arith.constant 0 : i32
    %c0_i32_1 = arith.constant 0 : i32
    return %c0_i32, %c0_i32_0 : i32, i32
  }
  func.func @transform_4(%arg0: i32) -> (i32, i32) {
    %c0_i32 = arith.constant 0 : i32
    %c0_i32_0 = arith.constant 0 : i32
    %c0_i32_1 = arith.constant 0 : i32
    return %c0_i32, %c0_i32_0 : i32, i32
  }
  func.func @transform_5(%arg0: i32) -> (i32, i32) {
    %c0_i32 = arith.constant 0 : i32
    %c0_i32_0 = arith.constant 0 : i32
    %c0_i32_1 = arith.constant 0 : i32
    return %c0_i32, %c0_i32_0 : i32, i32
  }
  func.func @transform_6(%arg0: i32) -> (i32, i32) {
    %c0_i32 = arith.constant 0 : i32
    %c0_i32_0 = arith.constant 0 : i32
    return %arg0, %c0_i32 : i32, i32
  }
}

</mosaic_0001>

<llo_original>
// kernel: tpu_custom_call.1
$region0: #{tpu_custom_call.1}
  #allocation0 [shape = 'u32[]', space=smem, size = 0x4, offset = 0x4, fixed_abs, tag = 'smem constant byte address 0x4 - core index']
  #allocation1 [shape = 'u32[144,128]{1,0:T(1,128)}', space=vmem, size = 0x12000, scoped, tag = 'internal scratch']
  %s0 = inlined_call_operand.vmem [shape: f32[16,128], index: 0, kind: input, shape index: {}]
  %s1 = inlined_call_operand.vmem [shape: f32[128,64], index: 1, kind: input, shape index: {}]
  %s2 = inlined_call_operand.vmem [shape: f32[1,64], index: 2, kind: input, shape index: {}]
  %s3 = inlined_call_operand.vmem [shape: f32[64,128], index: 3, kind: input, shape index: {}]
  %s4 = inlined_call_operand.vmem [shape: f32[1,128], index: 4, kind: input, shape index: {}]
  %s5 = inlined_call_operand.vmem [shape: f32[1,128], index: 5, kind: input, shape index: {}]
  %s6 = inlined_call_operand.hbm [shape: f32[16,128], index: 6, kind: output, shape index: {}]
  %s7 = sld [smem:[#allocation0]]
  $region34: #{tpu_custom_call.1} parent=0
    _
  %s9 = ssub.s32 1, %s7
  %s10 = scalar_select 0, %s9, %s7
  $region1: #{tpu_custom_call.1} parent=0
    #allocation2 [shape = 'u8[8192]{0}', space=vmem, size = 0x2000, scoped, tag = 'output window, operand 0, single buffered']
    #allocation3 [shape = 's32[1]{0}', space=sflag, size = 0x4, scoped, tag = 'scoped memory for tpu_custom_call.1']
    %11 = vsyncpa [#allocation3], 0
    // Predicated region
    $region2: #{tpu_custom_call.1} parent=1 // pred_check
      _
    $region3: #{tpu_custom_call.1} parent=1 // pred_check_branch
      %13 = sbr.rel (0) target = $region5
    $region4: #{tpu_custom_call.1} parent=1 // pred_region
      _
    $region5: #{tpu_custom_call.1} parent=1 // pred_fallthru
      _
    // Predicated region
    $region6: #{tpu_custom_call.1} parent=1 // pred_check
      _
    $region7: #{tpu_custom_call.1} parent=1 // pred_check_branch
      %15 = sbr.rel (0) target = $region9
    $region8: #{tpu_custom_call.1} parent=1 // pred_region
      _
    $region9: #{tpu_custom_call.1} parent=1 // pred_fallthru
      _
    // Predicated region
    $region10: #{tpu_custom_call.1} parent=1 // pred_check
      _
    $region11: #{tpu_custom_call.1} parent=1 // pred_check_branch
      %17 = sbr.rel (0) target = $region13
    $region12: #{tpu_custom_call.1} parent=1 // pred_region
      _
    $region13: #{tpu_custom_call.1} parent=1 // pred_fallthru
      _
    // Predicated region
    $region14: #{tpu_custom_call.1} parent=1 // pred_check
      _
    $region15: #{tpu_custom_call.1} parent=1 // pred_check_branch
      %19 = sbr.rel (0) target = $region17
    $region16: #{tpu_custom_call.1} parent=1 // pred_region
      _
    $region17: #{tpu_custom_call.1} parent=1 // pred_fallthru
      _
    // Predicated region
    $region18: #{tpu_custom_call.1} parent=1 // pred_check
      _
    $region19: #{tpu_custom_call.1} parent=1 // pred_check_branch
      %21 = sbr.rel (0) target = $region21
    $region20: #{tpu_custom_call.1} parent=1 // pred_region
      _
    $region21: #{tpu_custom_call.1} parent=1 // pred_fallthru
      _
    // Predicated region
    $region22: #{tpu_custom_call.1} parent=1 // pred_check
      _
    $region23: #{tpu_custom_call.1} parent=1 // pred_check_branch
      %23 = sbr.rel (0) target = $region25
    $region24: #{tpu_custom_call.1} parent=1 // pred_region
      _
    $region25: #{tpu_custom_call.1} parent=1 // pred_fallthru
      _
    %v24 = vld [vmem:[%s0] sm:$0xff]
    %v25 = vld [vmem:[%s0 + $0x8] sm:$0xff]
    %v26 = vld [vmem:[%s1] sm:$0xff]
    %v27 = vld [vmem:[%s1 + $0x8] sm:$0xff]
    %v28 = vld [vmem:[%s1 + $0x10] sm:$0xff]
    %v29 = vld [vmem:[%s1 + $0x18] sm:$0xff]
    %v30 = vld [vmem:[%s1 + $0x20] sm:$0xff]
    %v31 = vld [vmem:[%s1 + $0x28] sm:$0xff]
    %v32 = vld [vmem:[%s1 + $0x30] sm:$0xff]
    %v33 = vld [vmem:[%s1 + $0x38] sm:$0xff]
    %v34 = vld [vmem:[%s1 + $0x40] sm:$0xff]
    %v35 = vld [vmem:[%s1 + $0x48] sm:$0xff]
    %v36 = vld [vmem:[%s1 + $0x50] sm:$0xff]
    %v37 = vld [vmem:[%s1 + $0x58] sm:$0xff]
    %v38 = vld [vmem:[%s1 + $0x60] sm:$0xff]
    %v39 = vld [vmem:[%s1 + $0x68] sm:$0xff]
    %v40 = vld [vmem:[%s1 + $0x70] sm:$0xff]
    %v41 = vld [vmem:[%s1 + $0x78] sm:$0xff]
    %v42 = vld [vmem:[%s2] sm:$0x1]
    %v44 = vlaneseq
    %v45 = vshrl.u32 %v44, 7
    %v46 = vsub.s32 0, %v45
    %v47 = vrot.slane %v42, %v46
    %49 = vmatprep.subr.mxu0 0.0
    %50 = vmatpush1.msra.mxu0 %v26
    %51 = vmatprep.subr.mxu0 0.0
    %52 = vmatpush1.msra.mxu0 %v27
    %53 = vmatprep.subr.mxu0 0.0
    %54 = vmatpush1.msra.mxu0 %v28
    %55 = vmatprep.subr.mxu0 0.0
    %56 = vmatpush1.msra.mxu0 %v29
    %57 = vmatprep.subr.mxu0 0.0
    %58 = vmatpush1.msra.mxu0 %v30
    %59 = vmatprep.subr.mxu0 0.0
    %60 = vmatpush1.msra.mxu0 %v31
    %61 = vmatprep.subr.mxu0 0.0
    %62 = vmatpush1.msra.mxu0 %v32
    %63 = vmatprep.subr.mxu0 0.0
    %64 = vmatpush1.msra.mxu0 %v33
    %65 = vmatprep.subr.mxu0 0.0
    %66 = vmatpush1.msra.mxu0 %v34
    %67 = vmatprep.subr.mxu0 0.0
    %68 = vmatpush1.msra.mxu0 %v35
    %69 = vmatprep.subr.mxu0 0.0
    %70 = vmatpush1.msra.mxu0 %v36
    %71 = vmatprep.subr.mxu0 0.0
    %72 = vmatpush1.msra.mxu0 %v37
    %73 = vmatprep.subr.mxu0 0.0
    %74 = vmatpush1.msra.mxu0 %v38
    %75 = vmatprep.subr.mxu0 0.0
    %76 = vmatpush1.msra.mxu0 %v39
    %77 = vmatprep.subr.mxu0 0.0
    %78 = vmatpush1.msra.mxu0 %v40
    %79 = vmatprep.subr.mxu0 0.0
    %80 = vmatpush1.msra.mxu0 %v41
    %81 = vmatprep.subr.mxu0 0.0
    %82 = vmatpush1.msra.mxu0 0.0
    %83 = vmatprep.subr.mxu0 0.0
    %84 = vmatpush1.msra.mxu0 0.0
    %85 = vmatprep.subr.mxu0 0.0
    %86 = vmatpush1.msra.mxu0 0.0
    %87 = vmatprep.subr.mxu0 0.0
    %88 = vmatpush1.msra.mxu0 0.0
    %89 = vmatprep.subr.mxu0 0.0
    %90 = vmatpush1.msra.mxu0 0.0
    %91 = vmatprep.subr.mxu0 0.0
    %92 = vmatpush1.msra.mxu0 0.0
    %93 = vmatprep.subr.mxu0 0.0
    %94 = vmatpush1.msra.mxu0 0.0
    %95 = vmatprep.subr.mxu0 0.0
    %96 = vmatpush1.msra.mxu0 0.0
    %97 = vmatprep.subr.mxu0 0.0
    %98 = vmatpush1.msra.mxu0 0.0
    %99 = vmatprep.subr.mxu0 0.0
    %100 = vmatpush1.msra.mxu0 0.0
    %101 = vmatprep.subr.mxu0 0.0
    %102 = vmatpush1.msra.mxu0 0.0
    %103 = vmatprep.subr.mxu0 0.0
    %104 = vmatpush1.msra.mxu0 0.0
    %105 = vmatprep.subr.mxu0 0.0
    %106 = vmatpush1.msra.mxu0 0.0
    %107 = vmatprep.subr.mxu0 0.0
    %108 = vmatpush1.msra.mxu0 0.0
    %109 = vmatprep.subr.mxu0 0.0
    %110 = vmatpush1.msra.mxu0 0.0
    %111 = vmatprep.subr.mxu0 0.0
    %112 = vmatpush1.msra.mxu0 0.0
    %113 = vmatprep.mubr.f32.mxu0 0.0
    %114 = vmatmul.mubr.f32.gmra.mrb[0].mxu0 %v24
    %v115 = vpop.f32.mrb[0].mxu0
    %v116 = vadd.f32 %v47, %v115
    %v117 = vpop.f32.mrb[0].mxu0
    %118 = vmatprep.mubr.f32.mxu0 0.0
    %119 = vmatmul.mubr.f32.gmra.mrb[0].mxu0 %v25
    %v120 = vpop.f32.mrb[0].mxu0
    %v121 = vadd.f32 %v47, %v120
    %v122 = vpop.f32.mrb[0].mxu0
    %123 = vdwg.mxu0
    %v124 = vmul.f32 %v116, 0.5
    %v125 = vmul.f32 %v121, 0.5
    %v126 = vmul.f32 %v116, 0.70710677
    %v127 = vmul.f32 %v121, 0.70710677
    %v128 = verf.f32.pop %v126
    %v129 = verf.f32.pop %v127
    %v130 = vadd.f32 %v128, 1.0
    %v131 = vadd.f32 %v129, 1.0
    %v132 = vmul.f32 %v124, %v130
    %v133 = vmul.f32 %v125, %v131
    %v134 = vld [vmem:[%s3] sm:$0xff]
    %v135 = vld [vmem:[%s3 + $0x8] sm:$0xff]
    %v136 = vld [vmem:[%s3 + $0x10] sm:$0xff]
    %v137 = vld [vmem:[%s3 + $0x18] sm:$0xff]
    %v138 = vld [vmem:[%s3 + $0x20] sm:$0xff]
    %v139 = vld [vmem:[%s3 + $0x28] sm:$0xff]
    %v140 = vld [vmem:[%s3 + $0x30] sm:$0xff]
    %v141 = vld [vmem:[%s3 + $0x38] sm:$0xff]
    %v142 = vld [vmem:[%s4] sm:$0x1]
    %v144 = vlaneseq
    %v145 = vshrl.u32 %v144, 7
    %v146 = vsub.s32 0, %v145
    %v147 = vrot.slane %v142, %v146
    %vm149 = vcmask 523264
    %v151 = vsel %vm149, %v132, 0
    %v154 = vsel %vm149, %v133, 0
    %156 = vmatprep.subr.mxu0 0.0
    %157 = vmatpush1.msra.mxu0 %v134
    %158 = vmatprep.subr.mxu0 0.0
    %159 = vmatpush1.msra.mxu0 %v135
    %160 = vmatprep.subr.mxu0 0.0
    %161 = vmatpush1.msra.mxu0 %v136
    %162 = vmatprep.subr.mxu0 0.0
    %163 = vmatpush1.msra.mxu0 %v137
    %164 = vmatprep.subr.mxu0 0.0
    %165 = vmatpush1.msra.mxu0 %v138
    %166 = vmatprep.subr.mxu0 0.0
    %167 = vmatpush1.msra.mxu0 %v139
    %168 = vmatprep.subr.mxu0 0.0
    %169 = vmatpush1.msra.mxu0 %v140
    %170 = vmatprep.subr.mxu0 0.0
    %171 = vmatpush1.msra.mxu0 %v141
    %172 = vmatprep.subr.mxu0 0.0
    %173 = vmatpush1.msra.mxu0 0.0
    %174 = vmatprep.subr.mxu0 0.0
    %175 = vmatpush1.msra.mxu0 0.0
    %176 = vmatprep.subr.mxu0 0.0
    %177 = vmatpush1.msra.mxu0 0.0
    %178 = vmatprep.subr.mxu0 0.0
    %179 = vmatpush1.msra.mxu0 0.0
    %180 = vmatprep.subr.mxu0 0.0
    %181 = vmatpush1.msra.mxu0 0.0
    %182 = vmatprep.subr.mxu0 0.0
    %183 = vmatpush1.msra.mxu0 0.0
    %184 = vmatprep.subr.mxu0 0.0
    %185 = vmatpush1.msra.mxu0 0.0
    %186 = vmatprep.subr.mxu0 0.0
    %187 = vmatpush1.msra.mxu0 0.0
    %188 = vmatprep.subr.mxu0 0.0
    %189 = vmatpush1.msra.mxu0 0.0
    %190 = vmatprep.subr.mxu0 0.0
    %191 = vmatpush1.msra.mxu0 0.0
    %192 = vmatprep.subr.mxu0 0.0
    %193 = vmatpush1.msra.mxu0 0.0
    %194 = vmatprep.subr.mxu0 0.0
    %195 = vmatpush1.msra.mxu0 0.0
    %196 = vmatprep.subr.mxu0 0.0
    %197 = vmatpush1.msra.mxu0 0.0
    %198 = vmatprep.subr.mxu0 0.0
    %199 = vmatpush1.msra.mxu0 0.0
    %200 = vmatprep.subr.mxu0 0.0
    %201 = vmatpush1.msra.mxu0 0.0
    %202 = vmatprep.subr.mxu0 0.0
    %203 = vmatpush1.msra.mxu0 0.0
    %204 = vmatprep.subr.mxu0 0.0
    %205 = vmatpush1.msra.mxu0 0.0
    %206 = vmatprep.subr.mxu0 0.0
    %207 = vmatpush1.msra.mxu0 0.0
    %208 = vmatprep.subr.mxu0 0.0
    %209 = vmatpush1.msra.mxu0 0.0
    %210 = vmatprep.subr.mxu0 0.0
    %211 = vmatpush1.msra.mxu0 0.0
    %212 = vmatprep.subr.mxu0 0.0
    %213 = vmatpush1.msra.mxu0 0.0
    %214 = vmatprep.subr.mxu0 0.0
    %215 = vmatpush1.msra.mxu0 0.0
    %216 = vmatprep.subr.mxu0 0.0
    %217 = vmatpush1.msra.mxu0 0.0
    %218 = vmatprep.subr.mxu0 0.0
    %219 = vmatpush1.msra.mxu0 0.0
    %220 = vmatprep.mubr.f32.mxu0 0.0
    %221 = vmatmul.mubr.f32.gmra.mrb[0].mxu0 %v151
    %v222 = vpop.f32.mrb[0].mxu0
    %v223 = vadd.f32 %v147, %v222
    %v224 = vpop.f32.mrb[0].mxu0
    %225 = vmatprep.mubr.f32.mxu0 0.0
    %226 = vmatmul.mubr.f32.gmra.mrb[0].mxu0 %v154
    %v227 = vpop.f32.mrb[0].mxu0
    %v228 = vadd.f32 %v147, %v227
    %v229 = vpop.f32.mrb[0].mxu0
    %230 = vdwg.mxu0
    %v231 = vadd.f32 %v223, %v24
    %v232 = vadd.f32 %v228, %v25
    %v233 = vmul.f32 %v231, %v231
    %v234 = vmul.f32 %v232, %v232
    %235 = vadd.xlane.f32.xlu0 %v233
    %v236 = vpop.xlane.xlu0 %235
    %237 = vadd.xlane.f32.xlu0 %v234
    %v238 = vpop.xlane.xlu0 %237
    %v239 = vmul.f32 %v236, 0.03125
    %v240 = vmul.f32 %v238, 0.03125
    %v241 = vadd.f32 %v239, 1e-12
    %v242 = vadd.f32 %v240, 1e-12
    %v243 = vrsqrt.pop %v241
    %v244 = vrsqrt.pop %v242
    %v245 = vmul.f32 %v231, %v243
    %v246 = vmul.f32 %v232, %v244
    %v247 = vld [vmem:[%s5] sm:$0x1]
    %v249 = vlaneseq
    %v250 = vshrl.u32 %v249, 7
    %v251 = vsub.s32 0, %v250
    %v252 = vrot.slane %v247, %v251
    %v254 = vmul.f32 %v245, %v252
    %v255 = vmul.f32 %v246, %v252
    %256 = vst [vmem:[#allocation2] sm:$0xff] %v254
    %257 = vst [vmem:[#allocation2 + $0x8] sm:$0xff] %v255
    // Predicated region
    $region26: #{tpu_custom_call.1} parent=1 // pred_check
      _
    $region27: #{tpu_custom_call.1} parent=1 // pred_check_branch
      %259 = sbr.rel (0) target = $region29
    $region28: #{tpu_custom_call.1} parent=1 // pred_region
      %s261 = ssub.s32 256, 256
      %262 = vsyncadd [#allocation3], %s261
      %s263 = sshll.u32 [#allocation2], 4
      %s264 = int_to_ptr.vmem [resolvable:$true] %s263
      %269 = dma.vmem_to_hbm [thread:$0]  %s264, 256, %s6, [#allocation3], 128, 128, 8
    $region29: #{tpu_custom_call.1} parent=1 // pred_fallthru
      _
    // Predicated region
    $region30: #{tpu_custom_call.1} parent=1 // pred_check
      _
    $region31: #{tpu_custom_call.1} parent=1 // pred_check_branch
      %271 = sbr.rel (0) target = $region33
    $region32: #{tpu_custom_call.1} parent=1 // pred_region
      %272 = dma.done [#allocation3], 256
    $region33: #{tpu_custom_call.1} parent=1 // pred_fallthru
      _
    %273 = vsyncpa [#allocation3], 1

</llo_original>
